<compile_context>
chip_gen: v7x
topology: tpu7x:2x2x1
jax: 0.10.0
libtpu: 0.0.40
codegen_flags: <defaults>
</compile_context>

<pallas_src>
import jax
import jax.numpy as jnp
from jax.experimental import pallas as pl
from jax.experimental.pallas import tpu as pltpu


def _round_up(x, m):
    return ((x + m - 1) // m) * m


def critic_kernel(x_ref, w1_ref, w2_ref, w3_ref, w4_ref, aux_ref, out_ref):
    x = x_ref[...]                      # (TB, statedim + actiondim)
    aux = aux_ref[...]                  # (6, 256) packed biases / head
    b1 = aux[0:1, :64]                  # fused fc1 bias   (lanes 48:64 zero)
    b2 = aux[1:2, :64]                  # fused fc2 bias   (lanes 32:64 zero)
    b3 = aux[2:3, :]                    # fc3 bias
    b4 = aux[3:4, :]                    # fc4 bias
    w5 = aux[4:5, :]                    # fc5 weight row
    b5 = aux[5:6, 0:1]                  # fc5 bias scalar

    # fused fc1_state + fc1_action (block-diagonal weight)
    h = jnp.maximum(
        jnp.dot(x, w1_ref[...], preferred_element_type=jnp.float32) + b1, 0.0)
    # fused fc2_state + identity pass-through of the action branch
    #   -> h == concat([state_out, action_out], dim=1)
    h = jnp.maximum(
        jnp.dot(h, w2_ref[...], preferred_element_type=jnp.float32) + b2, 0.0)
    # fc3
    h = jnp.maximum(
        jnp.dot(h, w3_ref[...], preferred_element_type=jnp.float32) + b3, 0.0)
    # fc4
    h = jnp.maximum(
        jnp.dot(h, w4_ref[...], preferred_element_type=jnp.float32) + b4, 0.0)
    # fc5 head as VPU multiply + lane reduction (skips a 1-wide MXU pass)
    out_ref[...] = jnp.sum(h * w5, axis=-1, keepdims=True) + b5


def pack_params(p, statedim, actiondim):
    """Build the fused / packed kernel operands from plain nn.Linear params."""
    f_in = statedim + actiondim

    # fc1_state (statedim->16) and fc1_action (actiondim->32) as one
    # block-diagonal (f_in, 64) matrix; columns 48:64 are zero padding.
    w1 = jnp.zeros((f_in, 64), jnp.float32)
    w1 = w1.at[:statedim, :16].set(p["w1s"])
    w1 = w1.at[statedim:, 16:48].set(p["w1a"])

    # fc2_state (16->32) plus identity pass-through of the action branch.
    w2 = jnp.zeros((64, 64), jnp.float32)
    w2 = w2.at[:16, :32].set(p["w2s"])
    w2 = w2.at[16:48, 32:64].set(jnp.eye(32, dtype=jnp.float32))

    # single aux slab: rows = [b1_fused, b2_fused, b3, b4, w5_row, b5]
    aux = jnp.zeros((6, 256), jnp.float32)
    aux = aux.at[0, :16].set(p["b1s"])
    aux = aux.at[0, 16:48].set(p["b1a"])
    aux = aux.at[1, :32].set(p["b2s"])
    aux = aux.at[2, :].set(p["b3"])
    aux = aux.at[3, :].set(p["b4"])
    aux = aux.at[4, :].set(p["w5"][:, 0])
    aux = aux.at[5, 0].set(p["b5"][0])

    return (w1, w2, p["w3"], p["w4"], aux)


def critic_forward(state, action, packed, block_b=512):
    """state: (B, statedim) f32, action: (B, actiondim) f32 -> (B, 1) f32."""
    B, statedim = state.shape
    actiondim = action.shape[1]
    f_in = statedim + actiondim

    x = jnp.concatenate([state, action], axis=1).astype(jnp.float32)

    # batch tile: multiple of 8 (sublane), no larger than needed
    tb = min(_round_up(block_b, 8), _round_up(B, 8))
    bp = _round_up(B, tb)
    if bp != B:
        x = jnp.pad(x, ((0, bp - B), (0, 0)))

    w1, w2, w3, w4, aux = packed

    out = pl.pallas_call(
        critic_kernel,
        out_shape=jax.ShapeDtypeStruct((bp, 1), jnp.float32),
        grid=(bp // tb,),
        in_specs=[
            pl.BlockSpec((tb, f_in), lambda i: (i, 0)),      # x (batch-tiled)
            pl.BlockSpec((f_in, 64), lambda i: (0, 0)),      # w1 (fused, resident)
            pl.BlockSpec((64, 64), lambda i: (0, 0)),        # w2 (fused, resident)
            pl.BlockSpec((64, 256), lambda i: (0, 0)),       # w3 (resident)
            pl.BlockSpec((256, 256), lambda i: (0, 0)),      # w4 (resident)
            pl.BlockSpec((6, 256), lambda i: (0, 0)),        # packed biases / head
        ],
        out_specs=pl.BlockSpec((tb, 1), lambda i: (i, 0)),
        compiler_params=pltpu.CompilerParams(
            dimension_semantics=("parallel",)),
    )(x, w1, w2, w3, w4, aux)
    return out[:B]


def init_params(key, statedim, actiondim):
    """Synthetic parameters matching the nn.Linear shapes, stored as (in, out)."""
    ks = jax.random.split(key, 12)

    def w(k, fan_in, fan_out):
        bound = 1.0 / jnp.sqrt(fan_in)
        return jax.random.uniform(k, (fan_in, fan_out), jnp.float32, -bound, bound)

    def b(k, fan_in, fan_out):
        bound = 1.0 / jnp.sqrt(fan_in)
        return jax.random.uniform(k, (fan_out,), jnp.float32, -bound, bound)

    return {
        "w1s": w(ks[0], statedim, 16), "b1s": b(ks[1], statedim, 16),
        "w2s": w(ks[2], 16, 32),       "b2s": b(ks[3], 16, 32),
        "w1a": w(ks[4], actiondim, 32), "b1a": b(ks[5], actiondim, 32),
        "w3": w(ks[6], 64, 256),       "b3": b(ks[7], 64, 256),
        "w4": w(ks[8], 256, 256),      "b4": b(ks[9], 256, 256),
        "w5": w(ks[10], 256, 1),       "b5": b(ks[11], 256, 1),
    }


def critic_ref(state, action, p):
    """Pure-JAX reference mirroring the PyTorch forward exactly."""
    h = jax.nn.relu(state @ p["w1s"] + p["b1s"])
    state_out = jax.nn.relu(h @ p["w2s"] + p["b2s"])
    action_out = jax.nn.relu(action @ p["w1a"] + p["b1a"])
    concat = jnp.concatenate([state_out, action_out], axis=1)
    x = jax.nn.relu(concat @ p["w3"] + p["b3"])
    x = jax.nn.relu(x @ p["w4"] + p["b4"])
    return x @ p["w5"] + p["b5"]


if __name__ == "__main__":
    STATEDIM, ACTIONDIM = 8, 4

    key = jax.random.PRNGKey(0)
    k_params, k_state, k_action, k_state2, k_action2 = jax.random.split(key, 5)
    params = init_params(k_params, STATEDIM, ACTIONDIM)
    packed = pack_params(params, STATEDIM, ACTIONDIM)

    # small batch, single grid step
    B = 8
    state = jax.random.normal(k_state, (B, STATEDIM), jnp.float32)
    action = jax.random.normal(k_action, (B, ACTIONDIM), jnp.float32)
    out = critic_forward(state, action, packed)
    jax.block_until_ready(out)
    ref = critic_ref(state, action, params)
    assert out.shape == (B, 1)
    assert jnp.allclose(out, ref, atol=2e-4, rtol=2e-4)

    # ragged batch with small tile: exercises grid > 1, padding, parallel axis
    B2 = 20
    state2 = jax.random.normal(k_state2, (B2, STATEDIM), jnp.float32)
    action2 = jax.random.normal(k_action2, (B2, ACTIONDIM), jnp.float32)
    out2 = critic_forward(state2, action2, packed, block_b=8)
    jax.block_until_ready(out2)
    ref2 = critic_ref(state2, action2, params)
    assert out2.shape == (B2, 1)
    assert jnp.allclose(out2, ref2, atol=2e-4, rtol=2e-4)

    print("KERNEL_OK")
</pallas_src>

<mosaic_0001>
module attributes {stable_mosaic.version = 11 : i64} {
  func.func @critic_kernel(%arg0: i32, %arg1: memref<8x12xf32, #tpu.memory_space<vmem>>, %arg2: memref<12x64xf32, #tpu.memory_space<vmem>>, %arg3: memref<64x64xf32, #tpu.memory_space<vmem>>, %arg4: memref<64x256xf32, #tpu.memory_space<vmem>>, %arg5: memref<256x256xf32, #tpu.memory_space<vmem>>, %arg6: memref<6x256xf32, #tpu.memory_space<vmem>>, %arg7: memref<8x1xf32, #tpu.memory_space<vmem>>) attributes {dimension_semantics = [#tpu.dimension_semantics<parallel>], iteration_bounds = array<i64: 1>, scalar_prefetch = 0 : i64, scratch_operands = 0 : i64, tpu.core_type = #tpu.core_type<tc>, window_params = [{transform_indices = @transform_0, window_bounds = array<i64: 8, 12>}, {pipeline_mode = #tpu.pipeline_mode<synchronous>, transform_indices = @transform_1, window_bounds = array<i64: 12, 64>}, {pipeline_mode = #tpu.pipeline_mode<synchronous>, transform_indices = @transform_2, window_bounds = array<i64: 64, 64>}, {pipeline_mode = #tpu.pipeline_mode<synchronous>, transform_indices = @transform_3, window_bounds = array<i64: 64, 256>}, {pipeline_mode = #tpu.pipeline_mode<synchronous>, transform_indices = @transform_4, window_bounds = array<i64: 256, 256>}, {pipeline_mode = #tpu.pipeline_mode<synchronous>, transform_indices = @transform_5, window_bounds = array<i64: 6, 256>}, {transform_indices = @transform_6, window_bounds = array<i64: 8, 1>}]} {
    %c0 = arith.constant 0 : index
    %c0_0 = arith.constant 0 : index
    %0 = vector.load %arg1[%c0, %c0_0] : memref<8x12xf32, #tpu.memory_space<vmem>>, vector<8x12xf32>
    %c0_1 = arith.constant 0 : index
    %c0_2 = arith.constant 0 : index
    %1 = vector.load %arg6[%c0_1, %c0_2] : memref<6x256xf32, #tpu.memory_space<vmem>>, vector<6x256xf32>
    %2 = vector.extract_strided_slice %1 {offsets = [0, 0], sizes = [1, 64], strides = [1, 1]} : vector<6x256xf32> to vector<1x64xf32>
    %3 = vector.extract_strided_slice %1 {offsets = [1, 0], sizes = [1, 64], strides = [1, 1]} : vector<6x256xf32> to vector<1x64xf32>
    %4 = vector.extract_strided_slice %1 {offsets = [2, 0], sizes = [1, 256], strides = [1, 1]} : vector<6x256xf32> to vector<1x256xf32>
    %5 = vector.extract_strided_slice %1 {offsets = [3, 0], sizes = [1, 256], strides = [1, 1]} : vector<6x256xf32> to vector<1x256xf32>
    %6 = vector.extract_strided_slice %1 {offsets = [4, 0], sizes = [1, 256], strides = [1, 1]} : vector<6x256xf32> to vector<1x256xf32>
    %7 = vector.extract_strided_slice %1 {offsets = [5, 0], sizes = [1, 1], strides = [1, 1]} : vector<6x256xf32> to vector<1x1xf32>
    %c0_3 = arith.constant 0 : index
    %c0_4 = arith.constant 0 : index
    %8 = vector.load %arg2[%c0_3, %c0_4] : memref<12x64xf32, #tpu.memory_space<vmem>>, vector<12x64xf32>
    %cst = arith.constant dense<0.000000e+00> : vector<8x64xf32>
    %9 = tpu.matmul %0, %8, %cst {dimension_numbers = #tpu.dot_dimension_numbers<[1], [0], [0], [1], [0, 0, 1, 1], [], []>} : vector<8x12xf32>, vector<12x64xf32>, vector<8x64xf32> -> vector<8x64xf32>
    %10 = vector.broadcast %2 : vector<1x64xf32> to vector<8x64xf32>
    %11 = arith.addf %9, %10 : vector<8x64xf32>
    %cst_5 = arith.constant 0.000000e+00 : f32
    %12 = vector.broadcast %cst_5 : f32 to vector<8x64xf32>
    %13 = arith.maximumf %11, %12 : vector<8x64xf32>
    %c0_6 = arith.constant 0 : index
    %c0_7 = arith.constant 0 : index
    %14 = vector.load %arg3[%c0_6, %c0_7] : memref<64x64xf32, #tpu.memory_space<vmem>>, vector<64x64xf32>
    %cst_8 = arith.constant dense<0.000000e+00> : vector<8x64xf32>
    %15 = tpu.matmul %13, %14, %cst_8 {dimension_numbers = #tpu.dot_dimension_numbers<[1], [0], [0], [1], [0, 0, 1, 1], [], []>} : vector<8x64xf32>, vector<64x64xf32>, vector<8x64xf32> -> vector<8x64xf32>
    %16 = vector.broadcast %3 : vector<1x64xf32> to vector<8x64xf32>
    %17 = arith.addf %15, %16 : vector<8x64xf32>
    %cst_9 = arith.constant 0.000000e+00 : f32
    %18 = vector.broadcast %cst_9 : f32 to vector<8x64xf32>
    %19 = arith.maximumf %17, %18 : vector<8x64xf32>
    %c0_10 = arith.constant 0 : index
    %c0_11 = arith.constant 0 : index
    %20 = vector.load %arg4[%c0_10, %c0_11] : memref<64x256xf32, #tpu.memory_space<vmem>>, vector<64x256xf32>
    %cst_12 = arith.constant dense<0.000000e+00> : vector<8x256xf32>
    %21 = tpu.matmul %19, %20, %cst_12 {dimension_numbers = #tpu.dot_dimension_numbers<[1], [0], [0], [1], [0, 0, 1, 1], [], []>} : vector<8x64xf32>, vector<64x256xf32>, vector<8x256xf32> -> vector<8x256xf32>
    %22 = vector.broadcast %4 : vector<1x256xf32> to vector<8x256xf32>
    %23 = arith.addf %21, %22 : vector<8x256xf32>
    %cst_13 = arith.constant 0.000000e+00 : f32
    %24 = vector.broadcast %cst_13 : f32 to vector<8x256xf32>
    %25 = arith.maximumf %23, %24 : vector<8x256xf32>
    %c0_14 = arith.constant 0 : index
    %c0_15 = arith.constant 0 : index
    %26 = vector.load %arg5[%c0_14, %c0_15] : memref<256x256xf32, #tpu.memory_space<vmem>>, vector<256x256xf32>
    %cst_16 = arith.constant dense<0.000000e+00> : vector<8x256xf32>
    %27 = tpu.matmul %25, %26, %cst_16 {dimension_numbers = #tpu.dot_dimension_numbers<[1], [0], [0], [1], [0, 0, 1, 1], [], []>} : vector<8x256xf32>, vector<256x256xf32>, vector<8x256xf32> -> vector<8x256xf32>
    %28 = vector.broadcast %5 : vector<1x256xf32> to vector<8x256xf32>
    %29 = arith.addf %27, %28 : vector<8x256xf32>
    %cst_17 = arith.constant 0.000000e+00 : f32
    %30 = vector.broadcast %cst_17 : f32 to vector<8x256xf32>
    %31 = arith.maximumf %29, %30 : vector<8x256xf32>
    %32 = vector.broadcast %6 : vector<1x256xf32> to vector<8x256xf32>
    %33 = arith.mulf %31, %32 : vector<8x256xf32>
    %cst_18 = arith.constant dense<0.000000e+00> : vector<8xf32>
    %34 = vector.multi_reduction <add>, %33, %cst_18 [1] : vector<8x256xf32> to vector<8xf32>
    %35 = vector.shape_cast %34 : vector<8xf32> to vector<8x1xf32>
    %36 = vector.broadcast %7 : vector<1x1xf32> to vector<8x1xf32>
    %37 = arith.addf %35, %36 : vector<8x1xf32>
    %c0_19 = arith.constant 0 : index
    %c0_20 = arith.constant 0 : index
    %38 = vector.load %arg7[%c0_19, %c0_20] : memref<8x1xf32, #tpu.memory_space<vmem>>, vector<8x1xf32>
    tpu.vector_store %arg7[%c0_19, %c0_20], %37 {strides = array<i32>} : memref<8x1xf32, #tpu.memory_space<vmem>>, vector<8x1xf32>,
    return
  }
  func.func @transform_0(%arg0: i32) -> (i32, i32) {
    %c0_i32 = arith.constant 0 : i32
    %c0_i32_0 = arith.constant 0 : i32
    return %arg0, %c0_i32 : i32, i32
  }
  func.func @transform_1(%arg0: i32) -> (i32, i32) {
    %c0_i32 = arith.constant 0 : i32
    %c0_i32_0 = arith.constant 0 : i32
    %c0_i32_1 = arith.constant 0 : i32
    return %c0_i32, %c0_i32_0 : i32, i32
  }
  func.func @transform_2(%arg0: i32) -> (i32, i32) {
    %c0_i32 = arith.constant 0 : i32
    %c0_i32_0 = arith.constant 0 : i32
    %c0_i32_1 = arith.constant 0 : i32
    return %c0_i32, %c0_i32_0 : i32, i32
  }
  func.func @transform_3(%arg0: i32) -> (i32, i32) {
    %c0_i32 = arith.constant 0 : i32
    %c0_i32_0 = arith.constant 0 : i32
    %c0_i32_1 = arith.constant 0 : i32
    return %c0_i32, %c0_i32_0 : i32, i32
  }
  func.func @transform_4(%arg0: i32) -> (i32, i32) {
    %c0_i32 = arith.constant 0 : i32
    %c0_i32_0 = arith.constant 0 : i32
    %c0_i32_1 = arith.constant 0 : i32
    return %c0_i32, %c0_i32_0 : i32, i32
  }
  func.func @transform_5(%arg0: i32) -> (i32, i32) {
    %c0_i32 = arith.constant 0 : i32
    %c0_i32_0 = arith.constant 0 : i32
    %c0_i32_1 = arith.constant 0 : i32
    return %c0_i32, %c0_i32_0 : i32, i32
  }
  func.func @transform_6(%arg0: i32) -> (i32, i32) {
    %c0_i32 = arith.constant 0 : i32
    %c0_i32_0 = arith.constant 0 : i32
    return %arg0, %c0_i32 : i32, i32
  }
}

</mosaic_0001>

<llo_original>
// kernel: tpu_custom_call.1
$region0: #{tpu_custom_call.1}
  #allocation0 [shape = 'u32[]', space=smem, size = 0x4, offset = 0x4, fixed_abs, tag = 'smem constant byte address 0x4 - core index']
  #allocation1 [shape = 'u32[144,128]{1,0:T(1,128)}', space=vmem, size = 0x12000, scoped, tag = 'internal scratch']
  %s0 = inlined_call_operand.hbm [shape: f32[8,12], index: 0, kind: input, shape index: {}]
  %s1 = inlined_call_operand.hbm [shape: f32[12,64], index: 1, kind: input, shape index: {}]
  %s2 = inlined_call_operand.hbm [shape: f32[64,64], index: 2, kind: input, shape index: {}]
  %s3 = inlined_call_operand.hbm [shape: f32[64,256], index: 3, kind: input, shape index: {}]
  %s4 = inlined_call_operand.hbm [shape: f32[256,256], index: 4, kind: input, shape index: {}]
  %s5 = inlined_call_operand.vmem [shape: f32[6,256], index: 5, kind: input, shape index: {}]
  %s6 = inlined_call_operand.vmem [shape: f32[8,1], index: 6, kind: output, shape index: {}]
  %s7 = sld [smem:[#allocation0]]
  $region54: #{tpu_custom_call.1} parent=0
    _
  %s9 = ssub.s32 1, %s7
  %s10 = scalar_select 0, %s9, %s7
  $region1: #{tpu_custom_call.1} parent=0
    #allocation2 [shape = 'u8[4096]{0}', space=vmem, size = 0x1000, scoped, tag = 'input window, operand 0, single buffered']
    #allocation3 [shape = 's32[1]{0}', space=sflag, size = 0x4, scoped, tag = 'scoped memory for tpu_custom_call.1']
    #allocation4 [shape = 'u8[8192]{0}', space=vmem, size = 0x2000, scoped, tag = 'input window, operand 1, single buffered']
    #allocation5 [shape = 's32[1]{0}', space=sflag, size = 0x4, scoped, tag = 'scoped memory for tpu_custom_call.1']
    #allocation6 [shape = 'u8[32768]{0}', space=vmem, size = 0x8000, scoped, tag = 'input window, operand 2, single buffered']
    #allocation7 [shape = 'u8[65536]{0}', space=vmem, size = 0x10000, scoped, tag = 'input window, operand 3, single buffered']
    #allocation8 [shape = 's32[1]{0}', space=sflag, size = 0x4, scoped, tag = 'scoped memory for tpu_custom_call.1']
    #allocation9 [shape = 'u8[262144]{0}', space=vmem, size = 0x40000, scoped, tag = 'input window, operand 4, single buffered']
    %11 = vsyncpa [#allocation3], 0
    %12 = vsyncpa [#allocation5], 0
    %13 = vsyncpa [#allocation8], 0
    // Predicated region
    $region2: #{tpu_custom_call.1} parent=1 // pred_check
      _
    $region3: #{tpu_custom_call.1} parent=1 // pred_check_branch
      %15 = sbr.rel (0) target = $region5
    $region4: #{tpu_custom_call.1} parent=1 // pred_region
      %s17 = ssub.s32 128, 128
      %18 = vsyncadd [#allocation3], %s17
      %s20 = sshll.u32 [#allocation2], 4
      %s21 = int_to_ptr.vmem [resolvable:$true] %s20
      %23 = dma.hbm_to_vmem [thread:$0]  %s0, 128, %s21, [#allocation3]
    $region5: #{tpu_custom_call.1} parent=1 // pred_fallthru
      _
    // Predicated region
    $region6: #{tpu_custom_call.1} parent=1 // pred_check
      _
    $region7: #{tpu_custom_call.1} parent=1 // pred_check_branch
      %25 = sbr.rel (0) target = $region9
    $region8: #{tpu_custom_call.1} parent=1 // pred_region
      %s27 = ssub.s32 256, 256
      %28 = vsyncadd [#allocation5], %s27
      %s29 = sshll.u32 [#allocation4], 4
      %s30 = int_to_ptr.vmem [resolvable:$true] %s29
      %35 = dma.hbm_to_vmem [thread:$0]  %s1, 256, %s30, [#allocation5], 128, 128, 8
    $region9: #{tpu_custom_call.1} parent=1 // pred_fallthru
      _
    // Predicated region
    $region10: #{tpu_custom_call.1} parent=1 // pred_check
      _
    $region11: #{tpu_custom_call.1} parent=1 // pred_check_branch
      %37 = sbr.rel (0) target = $region13
    $region12: #{tpu_custom_call.1} parent=1 // pred_region
      %s39 = ssub.s32 1024, 1024
      %40 = vsyncadd [#allocation5], %s39
      %s41 = sshll.u32 [#allocation6], 4
      %s42 = int_to_ptr.vmem [resolvable:$true] %s41
      %47 = dma.hbm_to_vmem [thread:$0]  %s2, 1024, %s42, [#allocation5], 128, 128, 8
    $region13: #{tpu_custom_call.1} parent=1 // pred_fallthru
      _
    // Predicated region
    $region14: #{tpu_custom_call.1} parent=1 // pred_check
      _
    $region15: #{tpu_custom_call.1} parent=1 // pred_check_branch
      %49 = sbr.rel (0) target = $region17
    $region16: #{tpu_custom_call.1} parent=1 // pred_region
      %s51 = ssub.s32 2048, 2048
      %52 = vsyncadd [#allocation8], %s51
      %s53 = sshll.u32 [#allocation7], 4
      %s54 = int_to_ptr.vmem [resolvable:$true] %s53
      %59 = dma.hbm_to_vmem [thread:$0]  %s3, 2048, %s54, [#allocation8], 256, 256, 16
    $region17: #{tpu_custom_call.1} parent=1 // pred_fallthru
      _
    // Predicated region
    $region18: #{tpu_custom_call.1} parent=1 // pred_check
      _
    $region19: #{tpu_custom_call.1} parent=1 // pred_check_branch
      %61 = sbr.rel (0) target = $region21
    $region20: #{tpu_custom_call.1} parent=1 // pred_region
      %s63 = ssub.s32 8192, 8192
      %64 = vsyncadd [#allocation8], %s63
      %s65 = sshll.u32 [#allocation9], 4
      %s66 = int_to_ptr.vmem [resolvable:$true] %s65
      %71 = dma.hbm_to_vmem [thread:$0]  %s4, 8192, %s66, [#allocation8], 256, 256, 16
    $region21: #{tpu_custom_call.1} parent=1 // pred_fallthru
      _
    // Predicated region
    $region22: #{tpu_custom_call.1} parent=1 // pred_check
      _
    $region23: #{tpu_custom_call.1} parent=1 // pred_check_branch
      %73 = sbr.rel (0) target = $region25
    $region24: #{tpu_custom_call.1} parent=1 // pred_region
      _
    $region25: #{tpu_custom_call.1} parent=1 // pred_fallthru
      _
    // Predicated region
    $region26: #{tpu_custom_call.1} parent=1 // pred_check
      _
    $region27: #{tpu_custom_call.1} parent=1 // pred_check_branch
      %75 = sbr.rel (0) target = $region29
    $region28: #{tpu_custom_call.1} parent=1 // pred_region
      %76 = dma.done [#allocation3], 128
    $region29: #{tpu_custom_call.1} parent=1 // pred_fallthru
      _
    // Predicated region
    $region30: #{tpu_custom_call.1} parent=1 // pred_check
      _
    $region31: #{tpu_custom_call.1} parent=1 // pred_check_branch
      %78 = sbr.rel (0) target = $region33
    $region32: #{tpu_custom_call.1} parent=1 // pred_region
      %79 = dma.done [#allocation5], 256
    $region33: #{tpu_custom_call.1} parent=1 // pred_fallthru
      _
    // Predicated region
    $region34: #{tpu_custom_call.1} parent=1 // pred_check
      _
    $region35: #{tpu_custom_call.1} parent=1 // pred_check_branch
      %81 = sbr.rel (0) target = $region37
    $region36: #{tpu_custom_call.1} parent=1 // pred_region
      %82 = dma.done [#allocation5], 1024
    $region37: #{tpu_custom_call.1} parent=1 // pred_fallthru
      _
    // Predicated region
    $region38: #{tpu_custom_call.1} parent=1 // pred_check
      _
    $region39: #{tpu_custom_call.1} parent=1 // pred_check_branch
      %84 = sbr.rel (0) target = $region41
    $region40: #{tpu_custom_call.1} parent=1 // pred_region
      %85 = dma.done [#allocation8], 2048
    $region41: #{tpu_custom_call.1} parent=1 // pred_fallthru
      _
    // Predicated region
    $region42: #{tpu_custom_call.1} parent=1 // pred_check
      _
    $region43: #{tpu_custom_call.1} parent=1 // pred_check_branch
      %87 = sbr.rel (0) target = $region45
    $region44: #{tpu_custom_call.1} parent=1 // pred_region
      %88 = dma.done [#allocation8], 8192
    $region45: #{tpu_custom_call.1} parent=1 // pred_fallthru
      _
    %v89 = vld [vmem:[#allocation2] sm:$0xff]
    %v90 = vld [vmem:[%s5] sm:$0x3f]
    %v91 = vld [vmem:[%s5 + $0x8] sm:$0x3f]
    %v92 = vld [vmem:[#allocation4] sm:$0xff]
    %v93 = vld [vmem:[#allocation4 + $0x8] sm:$0xf]
    %v94 = vlaneseq
    %v95 = vshrl.u32 %v94, 7
    %v96 = vsub.s32 0, %v95
    %v97 = vrot.slane %v90, %v96
    %vm98 = vcmask 97280
    %v100 = vsel %vm98, %v89, 0
    %vm102 = vcmask 1043456
    %v104 = vsel %vm102, %v93, 0
    %106 = vmatprep.subr.mxu0 0.0
    %107 = vmatpush1.msra.mxu0 %v92
    %108 = vmatprep.subr.mxu0 0.0
    %109 = vmatpush1.msra.mxu0 %v104
    %110 = vmatprep.subr.mxu0 0.0
    %111 = vmatpush1.msra.mxu0 0.0
    %112 = vmatprep.subr.mxu0 0.0
    %113 = vmatpush1.msra.mxu0 0.0
    %114 = vmatprep.subr.mxu0 0.0
    %115 = vmatpush1.msra.mxu0 0.0
    %116 = vmatprep.subr.mxu0 0.0
    %117 = vmatpush1.msra.mxu0 0.0
    %118 = vmatprep.subr.mxu0 0.0
    %119 = vmatpush1.msra.mxu0 0.0
    %120 = vmatprep.subr.mxu0 0.0
    %121 = vmatpush1.msra.mxu0 0.0
    %122 = vmatprep.subr.mxu0 0.0
    %123 = vmatpush1.msra.mxu0 0.0
    %124 = vmatprep.subr.mxu0 0.0
    %125 = vmatpush1.msra.mxu0 0.0
    %126 = vmatprep.subr.mxu0 0.0
    %127 = vmatpush1.msra.mxu0 0.0
    %128 = vmatprep.subr.mxu0 0.0
    %129 = vmatpush1.msra.mxu0 0.0
    %130 = vmatprep.subr.mxu0 0.0
    %131 = vmatpush1.msra.mxu0 0.0
    %132 = vmatprep.subr.mxu0 0.0
    %133 = vmatpush1.msra.mxu0 0.0
    %134 = vmatprep.subr.mxu0 0.0
    %135 = vmatpush1.msra.mxu0 0.0
    %136 = vmatprep.subr.mxu0 0.0
    %137 = vmatpush1.msra.mxu0 0.0
    %138 = vmatprep.subr.mxu0 0.0
    %139 = vmatpush1.msra.mxu0 0.0
    %140 = vmatprep.subr.mxu0 0.0
    %141 = vmatpush1.msra.mxu0 0.0
    %142 = vmatprep.subr.mxu0 0.0
    %143 = vmatpush1.msra.mxu0 0.0
    %144 = vmatprep.subr.mxu0 0.0
    %145 = vmatpush1.msra.mxu0 0.0
    %146 = vmatprep.subr.mxu0 0.0
    %147 = vmatpush1.msra.mxu0 0.0
    %148 = vmatprep.subr.mxu0 0.0
    %149 = vmatpush1.msra.mxu0 0.0
    %150 = vmatprep.subr.mxu0 0.0
    %151 = vmatpush1.msra.mxu0 0.0
    %152 = vmatprep.subr.mxu0 0.0
    %153 = vmatpush1.msra.mxu0 0.0
    %154 = vmatprep.subr.mxu0 0.0
    %155 = vmatpush1.msra.mxu0 0.0
    %156 = vmatprep.subr.mxu0 0.0
    %157 = vmatpush1.msra.mxu0 0.0
    %158 = vmatprep.subr.mxu0 0.0
    %159 = vmatpush1.msra.mxu0 0.0
    %160 = vmatprep.subr.mxu0 0.0
    %161 = vmatpush1.msra.mxu0 0.0
    %162 = vmatprep.subr.mxu0 0.0
    %163 = vmatpush1.msra.mxu0 0.0
    %164 = vmatprep.subr.mxu0 0.0
    %165 = vmatpush1.msra.mxu0 0.0
    %166 = vmatprep.subr.mxu0 0.0
    %167 = vmatpush1.msra.mxu0 0.0
    %168 = vmatprep.subr.mxu0 0.0
    %169 = vmatpush1.msra.mxu0 0.0
    %170 = vmatprep.mubr.f32.mxu0 0.0
    %171 = vmatmul.mubr.f32.gmra.mrb[0].mxu0 %v100
    %v172 = vpop.f32.mrb[0].mxu0
    %v173 = vadd.f32 %v97, %v172
    %v174 = vpop.f32.mrb[0].mxu0
    %175 = vdwg.mxu0
    %v176 = vmax.f32 %v173, 0.0
    %v177 = vld [vmem:[#allocation6] sm:$0xff]
    %v178 = vld [vmem:[#allocation6 + $0x8] sm:$0xff]
    %v179 = vld [vmem:[#allocation6 + $0x10] sm:$0xff]
    %v180 = vld [vmem:[#allocation6 + $0x18] sm:$0xff]
    %v181 = vld [vmem:[#allocation6 + $0x20] sm:$0xff]
    %v182 = vld [vmem:[#allocation6 + $0x28] sm:$0xff]
    %v183 = vld [vmem:[#allocation6 + $0x30] sm:$0xff]
    %v184 = vld [vmem:[#allocation6 + $0x38] sm:$0xff]
    %v185 = vlaneseq
    %v186 = vshrl.u32 %v185, 7
    %v187 = vsub.s32 1, %v186
    %v188 = vrot.slane %v90, %v187
    %vm189 = vcmask 523264
    %v191 = vsel %vm189, %v176, 0
    %193 = vmatprep.subr.mxu0 0.0
    %194 = vmatpush1.msra.mxu0 %v177
    %195 = vmatprep.subr.mxu0 0.0
    %196 = vmatpush1.msra.mxu0 %v178
    %197 = vmatprep.subr.mxu0 0.0
    %198 = vmatpush1.msra.mxu0 %v179
    %199 = vmatprep.subr.mxu0 0.0
    %200 = vmatpush1.msra.mxu0 %v180
    %201 = vmatprep.subr.mxu0 0.0
    %202 = vmatpush1.msra.mxu0 %v181
    %203 = vmatprep.subr.mxu0 0.0
    %204 = vmatpush1.msra.mxu0 %v182
    %205 = vmatprep.subr.mxu0 0.0
    %206 = vmatpush1.msra.mxu0 %v183
    %207 = vmatprep.subr.mxu0 0.0
    %208 = vmatpush1.msra.mxu0 %v184
    %209 = vmatprep.subr.mxu0 0.0
    %210 = vmatpush1.msra.mxu0 0.0
    %211 = vmatprep.subr.mxu0 0.0
    %212 = vmatpush1.msra.mxu0 0.0
    %213 = vmatprep.subr.mxu0 0.0
    %214 = vmatpush1.msra.mxu0 0.0
    %215 = vmatprep.subr.mxu0 0.0
    %216 = vmatpush1.msra.mxu0 0.0
    %217 = vmatprep.subr.mxu0 0.0
    %218 = vmatpush1.msra.mxu0 0.0
    %219 = vmatprep.subr.mxu0 0.0
    %220 = vmatpush1.msra.mxu0 0.0
    %221 = vmatprep.subr.mxu0 0.0
    %222 = vmatpush1.msra.mxu0 0.0
    %223 = vmatprep.subr.mxu0 0.0
    %224 = vmatpush1.msra.mxu0 0.0
    %225 = vmatprep.subr.mxu0 0.0
    %226 = vmatpush1.msra.mxu0 0.0
    %227 = vmatprep.subr.mxu0 0.0
    %228 = vmatpush1.msra.mxu0 0.0
    %229 = vmatprep.subr.mxu0 0.0
    %230 = vmatpush1.msra.mxu0 0.0
    %231 = vmatprep.subr.mxu0 0.0
    %232 = vmatpush1.msra.mxu0 0.0
    %233 = vmatprep.subr.mxu0 0.0
    %234 = vmatpush1.msra.mxu0 0.0
    %235 = vmatprep.subr.mxu0 0.0
    %236 = vmatpush1.msra.mxu0 0.0
    %237 = vmatprep.subr.mxu0 0.0
    %238 = vmatpush1.msra.mxu0 0.0
    %239 = vmatprep.subr.mxu0 0.0
    %240 = vmatpush1.msra.mxu0 0.0
    %241 = vmatprep.subr.mxu0 0.0
    %242 = vmatpush1.msra.mxu0 0.0
    %243 = vmatprep.subr.mxu0 0.0
    %244 = vmatpush1.msra.mxu0 0.0
    %245 = vmatprep.subr.mxu0 0.0
    %246 = vmatpush1.msra.mxu0 0.0
    %247 = vmatprep.subr.mxu0 0.0
    %248 = vmatpush1.msra.mxu0 0.0
    %249 = vmatprep.subr.mxu0 0.0
    %250 = vmatpush1.msra.mxu0 0.0
    %251 = vmatprep.subr.mxu0 0.0
    %252 = vmatpush1.msra.mxu0 0.0
    %253 = vmatprep.subr.mxu0 0.0
    %254 = vmatpush1.msra.mxu0 0.0
    %255 = vmatprep.subr.mxu0 0.0
    %256 = vmatpush1.msra.mxu0 0.0
    %257 = vmatprep.mubr.f32.mxu0 0.0
    %258 = vmatmul.mubr.f32.gmra.mrb[0].mxu0 %v191
    %v259 = vpop.f32.mrb[0].mxu0
    %v260 = vadd.f32 %v188, %v259
    %v261 = vpop.f32.mrb[0].mxu0
    %262 = vdwg.mxu0
    %v263 = vmax.f32 %v260, 0.0
    %v264 = vld [vmem:[#allocation7] sm:$0xff]
    %v265 = vld [vmem:[#allocation7 + $0x8] sm:$0xff]
    %v266 = vld [vmem:[#allocation7 + $0x10] sm:$0xff]
    %v267 = vld [vmem:[#allocation7 + $0x18] sm:$0xff]
    %v268 = vld [vmem:[#allocation7 + $0x20] sm:$0xff]
    %v269 = vld [vmem:[#allocation7 + $0x28] sm:$0xff]
    %v270 = vld [vmem:[#allocation7 + $0x30] sm:$0xff]
    %v271 = vld [vmem:[#allocation7 + $0x38] sm:$0xff]
    %v272 = vld [vmem:[#allocation7 + $0x40] sm:$0xff]
    %v273 = vld [vmem:[#allocation7 + $0x48] sm:$0xff]
    %v274 = vld [vmem:[#allocation7 + $0x50] sm:$0xff]
    %v275 = vld [vmem:[#allocation7 + $0x58] sm:$0xff]
    %v276 = vld [vmem:[#allocation7 + $0x60] sm:$0xff]
    %v277 = vld [vmem:[#allocation7 + $0x68] sm:$0xff]
    %v278 = vld [vmem:[#allocation7 + $0x70] sm:$0xff]
    %v279 = vld [vmem:[#allocation7 + $0x78] sm:$0xff]
    %v280 = vlaneseq
    %v281 = vshrl.u32 %v280, 7
    %v282 = vsub.s32 2, %v281
    %v283 = vrot.slane %v90, %v282
    %v284 = vlaneseq
    %v285 = vshrl.u32 %v284, 7
    %v286 = vsub.s32 2, %v285
    %v287 = vrot.slane %v91, %v286
    %v289 = vsel %vm189, %v263, 0
    %291 = vmatprep.subr.mxu0 %v265
    %292 = vmatpush1.msra.mxu0 %v264
    %293 = vmatprep.subr.mxu0 %v267
    %294 = vmatpush1.msra.mxu0 %v266
    %295 = vmatprep.subr.mxu0 %v269
    %296 = vmatpush1.msra.mxu0 %v268
    %297 = vmatprep.subr.mxu0 %v271
    %298 = vmatpush1.msra.mxu0 %v270
    %299 = vmatprep.subr.mxu0 %v273
    %300 = vmatpush1.msra.mxu0 %v272
    %301 = vmatprep.subr.mxu0 %v275
    %302 = vmatpush1.msra.mxu0 %v274
    %303 = vmatprep.subr.mxu0 %v277
    %304 = vmatpush1.msra.mxu0 %v276
    %305 = vmatprep.subr.mxu0 %v279
    %306 = vmatpush1.msra.mxu0 %v278
    %307 = vmatprep.subr.mxu0 0.0
    %308 = vmatpush1.msra.mxu0 0.0
    %309 = vmatprep.subr.mxu0 0.0
    %310 = vmatpush1.msra.mxu0 0.0
    %311 = vmatprep.subr.mxu0 0.0
    %312 = vmatpush1.msra.mxu0 0.0
    %313 = vmatprep.subr.mxu0 0.0
    %314 = vmatpush1.msra.mxu0 0.0
    %315 = vmatprep.subr.mxu0 0.0
    %316 = vmatpush1.msra.mxu0 0.0
    %317 = vmatprep.subr.mxu0 0.0
    %318 = vmatpush1.msra.mxu0 0.0
    %319 = vmatprep.subr.mxu0 0.0
    %320 = vmatpush1.msra.mxu0 0.0
    %321 = vmatprep.subr.mxu0 0.0
    %322 = vmatpush1.msra.mxu0 0.0
    %323 = vmatprep.subr.mxu0 0.0
    %324 = vmatpush1.msra.mxu0 0.0
    %325 = vmatprep.subr.mxu0 0.0
    %326 = vmatpush1.msra.mxu0 0.0
    %327 = vmatprep.subr.mxu0 0.0
    %328 = vmatpush1.msra.mxu0 0.0
    %329 = vmatprep.subr.mxu0 0.0
    %330 = vmatpush1.msra.mxu0 0.0
    %331 = vmatprep.subr.mxu0 0.0
    %332 = vmatpush1.msra.mxu0 0.0
    %333 = vmatprep.subr.mxu0 0.0
    %334 = vmatpush1.msra.mxu0 0.0
    %335 = vmatprep.subr.mxu0 0.0
    %336 = vmatpush1.msra.mxu0 0.0
    %337 = vmatprep.subr.mxu0 0.0
    %338 = vmatpush1.msra.mxu0 0.0
    %339 = vmatprep.subr.mxu0 0.0
    %340 = vmatpush1.msra.mxu0 0.0
    %341 = vmatprep.subr.mxu0 0.0
    %342 = vmatpush1.msra.mxu0 0.0
    %343 = vmatprep.subr.mxu0 0.0
    %344 = vmatpush1.msra.mxu0 0.0
    %345 = vmatprep.subr.mxu0 0.0
    %346 = vmatpush1.msra.mxu0 0.0
    %347 = vmatprep.subr.mxu0 0.0
    %348 = vmatpush1.msra.mxu0 0.0
    %349 = vmatprep.subr.mxu0 0.0
    %350 = vmatpush1.msra.mxu0 0.0
    %351 = vmatprep.subr.mxu0 0.0
    %352 = vmatpush1.msra.mxu0 0.0
    %353 = vmatprep.subr.mxu0 0.0
    %354 = vmatpush1.msra.mxu0 0.0
    %355 = vmatprep.mubr.f32.mxu0 0.0
    %356 = vmatmul.mubr.f32.gmra.mrb[0].mxu0 %v289
    %v357 = vpop.f32.mrb[0].mxu0
    %v358 = vadd.f32 %v283, %v357
    %v359 = vpop.f32.mrb[0].mxu0
    %v360 = vadd.f32 %v287, %v359
    %361 = vdwg.mxu0
    %v362 = vmax.f32 %v358, 0.0
    %v363 = vmax.f32 %v360, 0.0
    %v364 = vld [vmem:[#allocation9] sm:$0xff]
    %v365 = vld [vmem:[#allocation9 + $0x8] sm:$0xff]
    %v366 = vld [vmem:[#allocation9 + $0x10] sm:$0xff]
    %v367 = vld [vmem:[#allocation9 + $0x18] sm:$0xff]
    %v368 = vld [vmem:[#allocation9 + $0x20] sm:$0xff]
    %v369 = vld [vmem:[#allocation9 + $0x28] sm:$0xff]
    %v370 = vld [vmem:[#allocation9 + $0x30] sm:$0xff]
    %v371 = vld [vmem:[#allocation9 + $0x38] sm:$0xff]
    %v372 = vld [vmem:[#allocation9 + $0x40] sm:$0xff]
    %v373 = vld [vmem:[#allocation9 + $0x48] sm:$0xff]
    %v374 = vld [vmem:[#allocation9 + $0x50] sm:$0xff]
    %v375 = vld [vmem:[#allocation9 + $0x58] sm:$0xff]
    %v376 = vld [vmem:[#allocation9 + $0x60] sm:$0xff]
    %v377 = vld [vmem:[#allocation9 + $0x68] sm:$0xff]
    %v378 = vld [vmem:[#allocation9 + $0x70] sm:$0xff]
    %v379 = vld [vmem:[#allocation9 + $0x78] sm:$0xff]
    %v380 = vld [vmem:[#allocation9 + $0x80] sm:$0xff]
    %v381 = vld [vmem:[#allocation9 + $0x88] sm:$0xff]
    %v382 = vld [vmem:[#allocation9 + $0x90] sm:$0xff]
    %v383 = vld [vmem:[#allocation9 + $0x98] sm:$0xff]
    %v384 = vld [vmem:[#allocation9 + $0xa0] sm:$0xff]
    %v385 = vld [vmem:[#allocation9 + $0xa8] sm:$0xff]
    %v386 = vld [vmem:[#allocation9 + $0xb0] sm:$0xff]
    %v387 = vld [vmem:[#allocation9 + $0xb8] sm:$0xff]
    %v388 = vld [vmem:[#allocation9 + $0xc0] sm:$0xff]
    %v389 = vld [vmem:[#allocation9 + $0xc8] sm:$0xff]
    %v390 = vld [vmem:[#allocation9 + $0xd0] sm:$0xff]
    %v391 = vld [vmem:[#allocation9 + $0xd8] sm:$0xff]
    %v392 = vld [vmem:[#allocation9 + $0xe0] sm:$0xff]
    %v393 = vld [vmem:[#allocation9 + $0xe8] sm:$0xff]
    %v394 = vld [vmem:[#allocation9 + $0xf0] sm:$0xff]
    %v395 = vld [vmem:[#allocation9 + $0xf8] sm:$0xff]
    %v396 = vld [vmem:[#allocation9 + $0x100] sm:$0xff]
    %v397 = vld [vmem:[#allocation9 + $0x108] sm:$0xff]
    %v398 = vld [vmem:[#allocation9 + $0x110] sm:$0xff]
    %v399 = vld [vmem:[#allocation9 + $0x118] sm:$0xff]
    %v400 = vld [vmem:[#allocation9 + $0x120] sm:$0xff]
    %v401 = vld [vmem:[#allocation9 + $0x128] sm:$0xff]
    %v402 = vld [vmem:[#allocation9 + $0x130] sm:$0xff]
    %v403 = vld [vmem:[#allocation9 + $0x138] sm:$0xff]
    %v404 = vld [vmem:[#allocation9 + $0x140] sm:$0xff]
    %v405 = vld [vmem:[#allocation9 + $0x148] sm:$0xff]
    %v406 = vld [vmem:[#allocation9 + $0x150] sm:$0xff]
    %v407 = vld [vmem:[#allocation9 + $0x158] sm:$0xff]
    %v408 = vld [vmem:[#allocation9 + $0x160] sm:$0xff]
    %v409 = vld [vmem:[#allocation9 + $0x168] sm:$0xff]
    %v410 = vld [vmem:[#allocation9 + $0x170] sm:$0xff]
    %v411 = vld [vmem:[#allocation9 + $0x178] sm:$0xff]
    %v412 = vld [vmem:[#allocation9 + $0x180] sm:$0xff]
    %v413 = vld [vmem:[#allocation9 + $0x188] sm:$0xff]
    %v414 = vld [vmem:[#allocation9 + $0x190] sm:$0xff]
    %v415 = vld [vmem:[#allocation9 + $0x198] sm:$0xff]
    %v416 = vld [vmem:[#allocation9 + $0x1a0] sm:$0xff]
    %v417 = vld [vmem:[#allocation9 + $0x1a8] sm:$0xff]
    %v418 = vld [vmem:[#allocation9 + $0x1b0] sm:$0xff]
    %v419 = vld [vmem:[#allocation9 + $0x1b8] sm:$0xff]
    %v420 = vld [vmem:[#allocation9 + $0x1c0] sm:$0xff]
    %v421 = vld [vmem:[#allocation9 + $0x1c8] sm:$0xff]
    %v422 = vld [vmem:[#allocation9 + $0x1d0] sm:$0xff]
    %v423 = vld [vmem:[#allocation9 + $0x1d8] sm:$0xff]
    %v424 = vld [vmem:[#allocation9 + $0x1e0] sm:$0xff]
    %v425 = vld [vmem:[#allocation9 + $0x1e8] sm:$0xff]
    %v426 = vld [vmem:[#allocation9 + $0x1f0] sm:$0xff]
    %v427 = vld [vmem:[#allocation9 + $0x1f8] sm:$0xff]
    %v428 = vlaneseq
    %v429 = vshrl.u32 %v428, 7
    %v430 = vsub.s32 3, %v429
    %v431 = vrot.slane %v90, %v430
    %v432 = vlaneseq
    %v433 = vshrl.u32 %v432, 7
    %v434 = vsub.s32 3, %v433
    %v435 = vrot.slane %v91, %v434
    %436 = vmatprep.subr.mxu0 %v365
    %437 = vmatpush1.msra.mxu0 %v364
    %438 = vmatprep.subr.mxu0 %v367
    %439 = vmatpush1.msra.mxu0 %v366
    %440 = vmatprep.subr.mxu0 %v369
    %441 = vmatpush1.msra.mxu0 %v368
    %442 = vmatprep.subr.mxu0 %v371
    %443 = vmatpush1.msra.mxu0 %v370
    %444 = vmatprep.subr.mxu0 %v373
    %445 = vmatpush1.msra.mxu0 %v372
    %446 = vmatprep.subr.mxu0 %v375
    %447 = vmatpush1.msra.mxu0 %v374
    %448 = vmatprep.subr.mxu0 %v377
    %449 = vmatpush1.msra.mxu0 %v376
    %450 = vmatprep.subr.mxu0 %v379
    %451 = vmatpush1.msra.mxu0 %v378
    %452 = vmatprep.subr.mxu0 %v381
    %453 = vmatpush1.msra.mxu0 %v380
    %454 = vmatprep.subr.mxu0 %v383
    %455 = vmatpush1.msra.mxu0 %v382
    %456 = vmatprep.subr.mxu0 %v385
    %457 = vmatpush1.msra.mxu0 %v384
    %458 = vmatprep.subr.mxu0 %v387
    %459 = vmatpush1.msra.mxu0 %v386
    %460 = vmatprep.subr.mxu0 %v389
    %461 = vmatpush1.msra.mxu0 %v388
    %462 = vmatprep.subr.mxu0 %v391
    %463 = vmatpush1.msra.mxu0 %v390
    %464 = vmatprep.subr.mxu0 %v393
    %465 = vmatpush1.msra.mxu0 %v392
    %466 = vmatprep.subr.mxu0 %v395
    %467 = vmatpush1.msra.mxu0 %v394
    %468 = vmatprep.subr.mxu0 %v397
    %469 = vmatpush1.msra.mxu0 %v396
    %470 = vmatprep.subr.mxu0 %v399
    %471 = vmatpush1.msra.mxu0 %v398
    %472 = vmatprep.subr.mxu0 %v401
    %473 = vmatpush1.msra.mxu0 %v400
    %474 = vmatprep.subr.mxu0 %v403
    %475 = vmatpush1.msra.mxu0 %v402
    %476 = vmatprep.subr.mxu0 %v405
    %477 = vmatpush1.msra.mxu0 %v404
    %478 = vmatprep.subr.mxu0 %v407
    %479 = vmatpush1.msra.mxu0 %v406
    %480 = vmatprep.subr.mxu0 %v409
    %481 = vmatpush1.msra.mxu0 %v408
    %482 = vmatprep.subr.mxu0 %v411
    %483 = vmatpush1.msra.mxu0 %v410
    %484 = vmatprep.subr.mxu0 %v413
    %485 = vmatpush1.msra.mxu0 %v412
    %486 = vmatprep.subr.mxu0 %v415
    %487 = vmatpush1.msra.mxu0 %v414
    %488 = vmatprep.subr.mxu0 %v417
    %489 = vmatpush1.msra.mxu0 %v416
    %490 = vmatprep.subr.mxu0 %v419
    %491 = vmatpush1.msra.mxu0 %v418
    %492 = vmatprep.subr.mxu0 %v421
    %493 = vmatpush1.msra.mxu0 %v420
    %494 = vmatprep.subr.mxu0 %v423
    %495 = vmatpush1.msra.mxu0 %v422
    %496 = vmatprep.subr.mxu0 %v425
    %497 = vmatpush1.msra.mxu0 %v424
    %498 = vmatprep.subr.mxu0 %v427
    %499 = vmatpush1.msra.mxu0 %v426
    %500 = vmatprep.mubr.f32.mxu0 %v363
    %501 = vmatmul.mubr.f32.gmra.mrb[0].mxu0 %v362
    %v502 = vpop.f32.mrb[0].mxu0
    %v503 = vadd.f32 %v431, %v502
    %v504 = vpop.f32.mrb[0].mxu0
    %v505 = vadd.f32 %v435, %v504
    %506 = vdwg.mxu0
    %v507 = vmax.f32 %v503, 0.0
    %v508 = vmax.f32 %v505, 0.0
    %v509 = vlaneseq
    %v510 = vshrl.u32 %v509, 7
    %v511 = vsub.s32 4, %v510
    %v512 = vrot.slane %v90, %v511
    %v513 = vlaneseq
    %v514 = vshrl.u32 %v513, 7
    %v515 = vsub.s32 4, %v514
    %v516 = vrot.slane %v91, %v515
    %v517 = vmul.f32 %v507, %v512
    %v518 = vmul.f32 %v508, %v516
    %v519 = vadd.f32 %v517, %v518
    %520 = vadd.xlane.f32.xlu0 %v519
    %v521 = vpop.xlane.xlu0 %520
    %v522 = vlaneseq
    %v523 = vshrl.u32 %v522, 7
    %v524 = vsub.s32 5, %v523
    %v525 = vrot.slane %v90, %v524
    %v526 = vadd.f32 %v521, %v525
    %vm527 = vcmask 7168
    %528 = vst.msk [vmem:[%s6] sm:$0xff] %vm527, %v526
    // Predicated region
    $region46: #{tpu_custom_call.1} parent=1 // pred_check
      _
    $region47: #{tpu_custom_call.1} parent=1 // pred_check_branch
      %530 = sbr.rel (0) target = $region49
    $region48: #{tpu_custom_call.1} parent=1 // pred_region
      _
    $region49: #{tpu_custom_call.1} parent=1 // pred_fallthru
      _
    // Predicated region
    $region50: #{tpu_custom_call.1} parent=1 // pred_check
      _
    $region51: #{tpu_custom_call.1} parent=1 // pred_check_branch
      %532 = sbr.rel (0) target = $region53
    $region52: #{tpu_custom_call.1} parent=1 // pred_region
      _
    $region53: #{tpu_custom_call.1} parent=1 // pred_fallthru
      _
    %533 = vsyncpa [#allocation3], 1
    %534 = vsyncpa [#allocation5], 1
    %535 = vsyncpa [#allocation8], 1

</llo_original>
